<compile_context>
chip_gen: v7x
topology: tpu7x:2x2x1
jax: 0.10.0
libtpu: 0.0.40
codegen_flags: <defaults>
</compile_context>

<pallas_src>
import functools

import numpy as np
import jax
import jax.numpy as jnp
from jax.experimental import pallas as pl
from jax.experimental.pallas import tpu as pltpu


def _round_up(x, m):
    return (x + m - 1) // m * m


# --------------------------------------------------------------------------------------
# Kernel
# --------------------------------------------------------------------------------------
def _triplanar_kernel(mask_ref, x_ref, w_ref, o_ref, p_ref, *,
                      H, W, Cin_pad, Cout, Cout_pad, Bblk, eps, slope):
    """One grid step: Bblk input planes -> Bblk normalized/averaged feature planes.

    mask_ref: (8, H*W)                 f32  per-tap validity masks (taps 0..3, 5..8)
    x_ref   : (Bblk, Cin_pad, H*W)     f32  channel-padded input planes
    w_ref   : (3*Cout_pad, 9*Cin_pad)  bf16 packed weights (3 branches x 9 taps)
    o_ref   : (Bblk, Cout, H*W)             lane-dense output planes
    p_ref   : (9*Cin_pad, Bblk*H*W)    bf16 im2col patch scratch
    """
    HW = H * W

    # ---- im2col via XLU lane rotations + precomputed validity masks -------------------
    for bb in range(Bblk):
        xb = x_ref[bb]                                       # (Cin_pad, HW) f32
        for t in range(9):
            oy = t // 3 - 1
            ox = t % 3 - 1
            d = oy * W + ox
            if d == 0:
                s = xb                                       # center tap: no shift/mask
            else:
                # s[:, q] = xb[:, (q + d) mod HW]; out-of-plane positions masked to zero.
                s = pltpu.roll(xb, (-d) % HW, axis=1)
                mrow = t if t < 4 else t - 1
                s = s * mask_ref[mrow:mrow + 1, :]
            p_ref[t * Cin_pad:(t + 1) * Cin_pad,
                  bb * HW:(bb + 1) * HW] = s.astype(p_ref.dtype)

    # ---- one bf16 MXU matmul covering all taps / branches / folded planes -------------
    acc = jnp.dot(w_ref[...], p_ref[...],
                  preferred_element_type=jnp.float32)        # (3*Cout_pad, Bblk*HW) f32

    # ---- per-plane InstanceNorm (one-pass, clamped var) + LeakyReLU + 3-way average ---
    inv_hw = 1.0 / HW
    for bb in range(Bblk):
        a = acc[:, bb * HW:(bb + 1) * HW]                    # (3*Cout_pad, HW)
        mean = jnp.sum(a, axis=1, keepdims=True) * inv_hw
        ex2 = jnp.sum(a * a, axis=1, keepdims=True) * inv_hw
        var = jnp.maximum(ex2 - mean * mean, 0.0)            # guard rsqrt against cancellation
        scale = jax.lax.rsqrt(var + eps) * (1.0 / 3.0)       # fold 1/3 plane-average in
        y = (a - mean) * scale
        y = jnp.maximum(y, slope * y)                        # LeakyReLU (slope < 1)
        out = (y[0:Cout]
               + y[Cout_pad:Cout_pad + Cout]
               + y[2 * Cout_pad:2 * Cout_pad + Cout])
        o_ref[bb] = out.astype(o_ref.dtype)


# --------------------------------------------------------------------------------------
# Wrapper
# --------------------------------------------------------------------------------------
def _vmem_bytes(Bblk, Cin_pad, Cout, Cout_pad, HW):
    x_blk = Bblk * Cin_pad * HW * 4
    o_blk = Bblk * Cout * HW * 4
    w_blk = 3 * Cout_pad * 9 * Cin_pad * 2
    m_blk = 8 * HW * 4
    p_scr = 9 * Cin_pad * Bblk * HW * 2
    acc = 3 * Cout_pad * Bblk * HW * 4
    # 2x: BlockSpec double-buffering of the streamed blocks.
    return 2 * (x_blk + o_blk + w_blk + m_blk) + p_scr + acc


def _pick_bblk(B, Cin_pad, Cout, Cout_pad, HW):
    # Fold batch into the lane axis only when plane boundaries stay 128-aligned.
    if HW % 128 != 0:
        return 1
    best = 1
    for cand in range(1, min(B, 8) + 1):
        if B % cand == 0 and 3 * _vmem_bytes(cand, Cin_pad, Cout, Cout_pad, HW) <= (48 << 20):
            best = cand
    return best


def _tap_masks(H, W):
    """(8, H*W) f32 validity masks for taps 0..3, 5..8 (center tap needs none)."""
    HW = H * W
    q = np.arange(HW)
    h, w = q // W, q % W
    rows = []
    for t in range(9):
        if t == 4:
            continue
        oy, ox = t // 3 - 1, t % 3 - 1
        m = np.ones(HW, np.float32)
        if oy == -1:
            m = m * (h > 0)
        elif oy == 1:
            m = m * (h < H - 1)
        if ox == -1:
            m = m * (w > 0)
        elif ox == 1:
            m = m * (w < W - 1)
        rows.append(m.astype(np.float32))
    return jnp.asarray(np.stack(rows, 0))


def triplanar_features(x_nchw, params, *, eps=1e-5, slope=0.2):
    """x_nchw: (B, Cin, H, W) float32 -> (B, Cout, H, W) float32."""
    B, Cin, H, W = x_nchw.shape
    Cout = params["w_xy"].shape[-1]
    HW = H * W
    Cin_pad = _round_up(Cin, 8)
    Cout_pad = _round_up(Cout, 8)
    Bblk = _pick_bblk(B, Cin_pad, Cout, Cout_pad, HW)

    # Pack the 3 HWIO kernels into one bf16 (3*Cout_pad, 9*Cin_pad) matrix.
    #   row = branch*Cout_pad + co ; col = (kh*3 + kw)*Cin_pad + ci
    # Conv biases are dropped: valid only because the InstanceNorm is affine-free with
    # per-instance stats, so a per-channel constant is exactly removed by the mean.
    w_all = jnp.stack([params["w_xy"], params["w_xz"], params["w_yz"]], axis=0)
    w_all = jnp.pad(w_all, ((0, 0), (0, 0), (0, 0),
                            (0, Cin_pad - Cin), (0, Cout_pad - Cout)))
    w_mat = (jnp.transpose(w_all, (0, 4, 1, 2, 3))
             .reshape(3 * Cout_pad, 9 * Cin_pad).astype(jnp.bfloat16))

    # Channel-pad the input so every tap store / matmul row block is sublane-aligned.
    x_flat = x_nchw.reshape(B, Cin, HW)               # contiguous -> free reshape
    if Cin_pad != Cin:
        x_flat = jnp.pad(x_flat, ((0, 0), (0, Cin_pad - Cin), (0, 0)))

    masks = _tap_masks(H, W)

    kernel = functools.partial(
        _triplanar_kernel, H=H, W=W, Cin_pad=Cin_pad, Cout=Cout,
        Cout_pad=Cout_pad, Bblk=Bblk, eps=eps, slope=slope)

    vmem_limit = int(min(64 << 20,
                         max(32 << 20,
                             3 * _vmem_bytes(Bblk, Cin_pad, Cout, Cout_pad, HW))))
    cost = pl.CostEstimate(
        flops=2 * B * (3 * Cout_pad) * (9 * Cin_pad) * HW,
        transcendentals=B * 3 * Cout_pad,
        bytes_accessed=(x_flat.size * 4 + B * Cout * HW * 4
                        + w_mat.size * 2 + masks.size * 4))

    out_flat = pl.pallas_call(
        kernel,
        out_shape=jax.ShapeDtypeStruct((B, Cout, HW), x_nchw.dtype),
        grid=(B // Bblk,),
        in_specs=[
            pl.BlockSpec((8, HW), lambda g: (0, 0)),                      # tap masks (resident)
            pl.BlockSpec((Bblk, Cin_pad, HW), lambda g: (g, 0, 0)),       # input planes
            pl.BlockSpec((3 * Cout_pad, 9 * Cin_pad), lambda g: (0, 0)),  # packed weights
        ],
        out_specs=pl.BlockSpec((Bblk, Cout, HW), lambda g: (g, 0, 0)),
        scratch_shapes=[
            pltpu.VMEM((9 * Cin_pad, Bblk * HW), jnp.bfloat16),           # im2col patches
        ],
        compiler_params=pltpu.CompilerParams(
            dimension_semantics=("parallel",),
            vmem_limit_bytes=vmem_limit),
        cost_estimate=cost,
    )(masks, x_flat, w_mat)

    return out_flat.reshape(B, Cout, H, W)


# --------------------------------------------------------------------------------------
# Pure-JAX reference (matches the PyTorch forward, including biases) + test harness
# --------------------------------------------------------------------------------------
def _reference(x_nchw, params, eps=1e-5, slope=0.2):
    x = jnp.transpose(x_nchw, (0, 2, 3, 1))

    def branch(w, b):
        y = jax.lax.conv_general_dilated(
            x, w, window_strides=(1, 1), padding="SAME",
            dimension_numbers=("NHWC", "HWIO", "NHWC"))
        y = y + b
        mean = jnp.mean(y, axis=(1, 2), keepdims=True)
        var = jnp.mean((y - mean) ** 2, axis=(1, 2), keepdims=True)
        y = (y - mean) / jnp.sqrt(var + eps)
        return jnp.where(y >= 0, y, slope * y)

    out = (branch(params["w_xy"], params["b_xy"])
           + branch(params["w_xz"], params["b_xz"])
           + branch(params["w_yz"], params["b_yz"])) / 3.0
    return jnp.transpose(out, (0, 3, 1, 2))


def _init_params(key, in_channels, out_channels):
    ks = jax.random.split(key, 6)
    scale = 0.1

    def w(k):
        return scale * jax.random.normal(k, (3, 3, in_channels, out_channels), jnp.float32)

    def b(k):
        return scale * jax.random.normal(k, (1, out_channels), jnp.float32)

    return {
        "w_xy": w(ks[0]), "b_xy": b(ks[1]),
        "w_xz": w(ks[2]), "b_xz": b(ks[3]),
        "w_yz": w(ks[4]), "b_yz": b(ks[5]),
    }


if __name__ == "__main__":
    B, Cin, Cout, H, W = 2, 4, 8, 16, 16
    key = jax.random.PRNGKey(0)
    k_x, k_p = jax.random.split(key)

    x = jax.random.normal(k_x, (B, Cin, H, W), jnp.float32)
    params = _init_params(k_p, Cin, Cout)

    out = jax.block_until_ready(triplanar_features(x, params))
    ref = jax.block_until_ready(_reference(x, params))

    assert out.shape == (B, Cout, H, W), out.shape
    # Tolerance sized for bf16 storage of weights / im2col patches (f32 accumulation).
    max_err = float(jnp.max(jnp.abs(out - ref)))
    assert jnp.allclose(out, ref, atol=3e-2, rtol=3e-2), max_err

    print("KERNEL_OK")
</pallas_src>

<mosaic_0001>
module attributes {stable_mosaic.version = 11 : i64} {
  func.func @_triplanar_kernel(%arg0: i32, %arg1: memref<8x256xf32, #tpu.memory_space<vmem>>, %arg2: memref<2x8x256xf32, #tpu.memory_space<vmem>>, %arg3: memref<24x72xbf16, #tpu.memory_space<vmem>>, %arg4: memref<2x8x256xf32, #tpu.memory_space<vmem>>, %arg5: memref<72x512xbf16, #tpu.memory_space<vmem>>) attributes {dimension_semantics = [#tpu.dimension_semantics<parallel>], iteration_bounds = array<i64: 1>, scalar_prefetch = 0 : i64, scratch_operands = 1 : i64, tpu.core_type = #tpu.core_type<tc>, window_params = [{pipeline_mode = #tpu.pipeline_mode<synchronous>, transform_indices = @transform_0, window_bounds = array<i64: 8, 256>}, {transform_indices = @transform_1, window_bounds = array<i64: 2, 8, 256>}, {pipeline_mode = #tpu.pipeline_mode<synchronous>, transform_indices = @transform_2, window_bounds = array<i64: 24, 72>}, {transform_indices = @transform_3, window_bounds = array<i64: 2, 8, 256>}]} {
    %c0 = arith.constant 0 : index
    %c0_0 = arith.constant 0 : index
    %c0_1 = arith.constant 0 : index
    %0 = vector.load %arg2[%c0, %c0_0, %c0_1] : memref<2x8x256xf32, #tpu.memory_space<vmem>>, vector<1x8x256xf32>
    %1 = vector.shape_cast %0 : vector<1x8x256xf32> to vector<8x256xf32>
    %c17_i32 = arith.constant 17 : i32
    %2 = tpu.dynamic_rotate %1 by %c17_i32 dim 1 : vector<8x256xf32>, i32 -> vector<8x256xf32>
    %c0_2 = arith.constant 0 : index
    %c0_3 = arith.constant 0 : index
    %3 = vector.load %arg1[%c0_2, %c0_3] : memref<8x256xf32, #tpu.memory_space<vmem>>, vector<1x256xf32>
    %4 = vector.broadcast %3 : vector<1x256xf32> to vector<8x256xf32>
    %5 = arith.mulf %2, %4 : vector<8x256xf32>
    %6 = arith.truncf %5 : vector<8x256xf32> to vector<8x256xbf16>
    %c0_4 = arith.constant 0 : index
    %c0_5 = arith.constant 0 : index
    %7 = vector.load %arg5[%c0_4, %c0_5] : memref<72x512xbf16, #tpu.memory_space<vmem>>, vector<8x256xbf16>
    tpu.vector_store %arg5[%c0_4, %c0_5], %6 {strides = array<i32>} : memref<72x512xbf16, #tpu.memory_space<vmem>>, vector<8x256xbf16>,
    %c16_i32 = arith.constant 16 : i32
    %8 = tpu.dynamic_rotate %1 by %c16_i32 dim 1 : vector<8x256xf32>, i32 -> vector<8x256xf32>
    %c1 = arith.constant 1 : index
    %c0_6 = arith.constant 0 : index
    %9 = vector.load %arg1[%c1, %c0_6] : memref<8x256xf32, #tpu.memory_space<vmem>>, vector<1x256xf32>
    %10 = vector.broadcast %9 : vector<1x256xf32> to vector<8x256xf32>
    %11 = arith.mulf %8, %10 : vector<8x256xf32>
    %12 = arith.truncf %11 : vector<8x256xf32> to vector<8x256xbf16>
    %c8 = arith.constant 8 : index
    %c0_7 = arith.constant 0 : index
    %13 = vector.load %arg5[%c8, %c0_7] : memref<72x512xbf16, #tpu.memory_space<vmem>>, vector<8x256xbf16>
    tpu.vector_store %arg5[%c8, %c0_7], %12 {strides = array<i32>} : memref<72x512xbf16, #tpu.memory_space<vmem>>, vector<8x256xbf16>,
    %c15_i32 = arith.constant 15 : i32
    %14 = tpu.dynamic_rotate %1 by %c15_i32 dim 1 : vector<8x256xf32>, i32 -> vector<8x256xf32>
    %c2 = arith.constant 2 : index
    %c0_8 = arith.constant 0 : index
    %15 = vector.load %arg1[%c2, %c0_8] : memref<8x256xf32, #tpu.memory_space<vmem>>, vector<1x256xf32>
    %16 = vector.broadcast %15 : vector<1x256xf32> to vector<8x256xf32>
    %17 = arith.mulf %14, %16 : vector<8x256xf32>
    %18 = arith.truncf %17 : vector<8x256xf32> to vector<8x256xbf16>
    %c16 = arith.constant 16 : index
    %c0_9 = arith.constant 0 : index
    %19 = vector.load %arg5[%c16, %c0_9] : memref<72x512xbf16, #tpu.memory_space<vmem>>, vector<8x256xbf16>
    tpu.vector_store %arg5[%c16, %c0_9], %18 {strides = array<i32>} : memref<72x512xbf16, #tpu.memory_space<vmem>>, vector<8x256xbf16>,
    %c1_i32 = arith.constant 1 : i32
    %20 = tpu.dynamic_rotate %1 by %c1_i32 dim 1 : vector<8x256xf32>, i32 -> vector<8x256xf32>
    %c3 = arith.constant 3 : index
    %c0_10 = arith.constant 0 : index
    %21 = vector.load %arg1[%c3, %c0_10] : memref<8x256xf32, #tpu.memory_space<vmem>>, vector<1x256xf32>
    %22 = vector.broadcast %21 : vector<1x256xf32> to vector<8x256xf32>
    %23 = arith.mulf %20, %22 : vector<8x256xf32>
    %24 = arith.truncf %23 : vector<8x256xf32> to vector<8x256xbf16>
    %c24 = arith.constant 24 : index
    %c0_11 = arith.constant 0 : index
    %25 = vector.load %arg5[%c24, %c0_11] : memref<72x512xbf16, #tpu.memory_space<vmem>>, vector<8x256xbf16>
    tpu.vector_store %arg5[%c24, %c0_11], %24 {strides = array<i32>} : memref<72x512xbf16, #tpu.memory_space<vmem>>, vector<8x256xbf16>,
    %26 = arith.truncf %1 : vector<8x256xf32> to vector<8x256xbf16>
    %c32 = arith.constant 32 : index
    %c0_12 = arith.constant 0 : index
    %27 = vector.load %arg5[%c32, %c0_12] : memref<72x512xbf16, #tpu.memory_space<vmem>>, vector<8x256xbf16>
    tpu.vector_store %arg5[%c32, %c0_12], %26 {strides = array<i32>} : memref<72x512xbf16, #tpu.memory_space<vmem>>, vector<8x256xbf16>,
    %c255_i32 = arith.constant 255 : i32
    %28 = tpu.dynamic_rotate %1 by %c255_i32 dim 1 : vector<8x256xf32>, i32 -> vector<8x256xf32>
    %c4 = arith.constant 4 : index
    %c0_13 = arith.constant 0 : index
    %29 = vector.load %arg1[%c4, %c0_13] : memref<8x256xf32, #tpu.memory_space<vmem>>, vector<1x256xf32>
    %30 = vector.broadcast %29 : vector<1x256xf32> to vector<8x256xf32>
    %31 = arith.mulf %28, %30 : vector<8x256xf32>
    %32 = arith.truncf %31 : vector<8x256xf32> to vector<8x256xbf16>
    %c40 = arith.constant 40 : index
    %c0_14 = arith.constant 0 : index
    %33 = vector.load %arg5[%c40, %c0_14] : memref<72x512xbf16, #tpu.memory_space<vmem>>, vector<8x256xbf16>
    tpu.vector_store %arg5[%c40, %c0_14], %32 {strides = array<i32>} : memref<72x512xbf16, #tpu.memory_space<vmem>>, vector<8x256xbf16>,
    %c241_i32 = arith.constant 241 : i32
    %34 = tpu.dynamic_rotate %1 by %c241_i32 dim 1 : vector<8x256xf32>, i32 -> vector<8x256xf32>
    %c5 = arith.constant 5 : index
    %c0_15 = arith.constant 0 : index
    %35 = vector.load %arg1[%c5, %c0_15] : memref<8x256xf32, #tpu.memory_space<vmem>>, vector<1x256xf32>
    %36 = vector.broadcast %35 : vector<1x256xf32> to vector<8x256xf32>
    %37 = arith.mulf %34, %36 : vector<8x256xf32>
    %38 = arith.truncf %37 : vector<8x256xf32> to vector<8x256xbf16>
    %c48 = arith.constant 48 : index
    %c0_16 = arith.constant 0 : index
    %39 = vector.load %arg5[%c48, %c0_16] : memref<72x512xbf16, #tpu.memory_space<vmem>>, vector<8x256xbf16>
    tpu.vector_store %arg5[%c48, %c0_16], %38 {strides = array<i32>} : memref<72x512xbf16, #tpu.memory_space<vmem>>, vector<8x256xbf16>,
    %c240_i32 = arith.constant 240 : i32
    %40 = tpu.dynamic_rotate %1 by %c240_i32 dim 1 : vector<8x256xf32>, i32 -> vector<8x256xf32>
    %c6 = arith.constant 6 : index
    %c0_17 = arith.constant 0 : index
    %41 = vector.load %arg1[%c6, %c0_17] : memref<8x256xf32, #tpu.memory_space<vmem>>, vector<1x256xf32>
    %42 = vector.broadcast %41 : vector<1x256xf32> to vector<8x256xf32>
    %43 = arith.mulf %40, %42 : vector<8x256xf32>
    %44 = arith.truncf %43 : vector<8x256xf32> to vector<8x256xbf16>
    %c56 = arith.constant 56 : index
    %c0_18 = arith.constant 0 : index
    %45 = vector.load %arg5[%c56, %c0_18] : memref<72x512xbf16, #tpu.memory_space<vmem>>, vector<8x256xbf16>
    tpu.vector_store %arg5[%c56, %c0_18], %44 {strides = array<i32>} : memref<72x512xbf16, #tpu.memory_space<vmem>>, vector<8x256xbf16>,
    %c239_i32 = arith.constant 239 : i32
    %46 = tpu.dynamic_rotate %1 by %c239_i32 dim 1 : vector<8x256xf32>, i32 -> vector<8x256xf32>
    %c7 = arith.constant 7 : index
    %c0_19 = arith.constant 0 : index
    %47 = vector.load %arg1[%c7, %c0_19] : memref<8x256xf32, #tpu.memory_space<vmem>>, vector<1x256xf32>
    %48 = vector.broadcast %47 : vector<1x256xf32> to vector<8x256xf32>
    %49 = arith.mulf %46, %48 : vector<8x256xf32>
    %50 = arith.truncf %49 : vector<8x256xf32> to vector<8x256xbf16>
    %c64 = arith.constant 64 : index
    %c0_20 = arith.constant 0 : index
    %51 = vector.load %arg5[%c64, %c0_20] : memref<72x512xbf16, #tpu.memory_space<vmem>>, vector<8x256xbf16>
    tpu.vector_store %arg5[%c64, %c0_20], %50 {strides = array<i32>} : memref<72x512xbf16, #tpu.memory_space<vmem>>, vector<8x256xbf16>,
    %c1_21 = arith.constant 1 : index
    %c0_22 = arith.constant 0 : index
    %c0_23 = arith.constant 0 : index
    %52 = vector.load %arg2[%c1_21, %c0_22, %c0_23] : memref<2x8x256xf32, #tpu.memory_space<vmem>>, vector<1x8x256xf32>
    %53 = vector.shape_cast %52 : vector<1x8x256xf32> to vector<8x256xf32>
    %c17_i32_24 = arith.constant 17 : i32
    %54 = tpu.dynamic_rotate %53 by %c17_i32_24 dim 1 : vector<8x256xf32>, i32 -> vector<8x256xf32>
    %c0_25 = arith.constant 0 : index
    %c0_26 = arith.constant 0 : index
    %55 = vector.load %arg1[%c0_25, %c0_26] : memref<8x256xf32, #tpu.memory_space<vmem>>, vector<1x256xf32>
    %56 = vector.broadcast %55 : vector<1x256xf32> to vector<8x256xf32>
    %57 = arith.mulf %54, %56 : vector<8x256xf32>
    %58 = arith.truncf %57 : vector<8x256xf32> to vector<8x256xbf16>
    %c0_27 = arith.constant 0 : index
    %c256 = arith.constant 256 : index
    %59 = vector.load %arg5[%c0_27, %c256] : memref<72x512xbf16, #tpu.memory_space<vmem>>, vector<8x256xbf16>
    tpu.vector_store %arg5[%c0_27, %c256], %58 {strides = array<i32>} : memref<72x512xbf16, #tpu.memory_space<vmem>>, vector<8x256xbf16>,
    %c16_i32_28 = arith.constant 16 : i32
    %60 = tpu.dynamic_rotate %53 by %c16_i32_28 dim 1 : vector<8x256xf32>, i32 -> vector<8x256xf32>
    %c1_29 = arith.constant 1 : index
    %c0_30 = arith.constant 0 : index
    %61 = vector.load %arg1[%c1_29, %c0_30] : memref<8x256xf32, #tpu.memory_space<vmem>>, vector<1x256xf32>
    %62 = vector.broadcast %61 : vector<1x256xf32> to vector<8x256xf32>
    %63 = arith.mulf %60, %62 : vector<8x256xf32>
    %64 = arith.truncf %63 : vector<8x256xf32> to vector<8x256xbf16>
    %c8_31 = arith.constant 8 : index
    %c256_32 = arith.constant 256 : index
    %65 = vector.load %arg5[%c8_31, %c256_32] : memref<72x512xbf16, #tpu.memory_space<vmem>>, vector<8x256xbf16>
    tpu.vector_store %arg5[%c8_31, %c256_32], %64 {strides = array<i32>} : memref<72x512xbf16, #tpu.memory_space<vmem>>, vector<8x256xbf16>,
    %c15_i32_33 = arith.constant 15 : i32
    %66 = tpu.dynamic_rotate %53 by %c15_i32_33 dim 1 : vector<8x256xf32>, i32 -> vector<8x256xf32>
    %c2_34 = arith.constant 2 : index
    %c0_35 = arith.constant 0 : index
    %67 = vector.load %arg1[%c2_34, %c0_35] : memref<8x256xf32, #tpu.memory_space<vmem>>, vector<1x256xf32>
    %68 = vector.broadcast %67 : vector<1x256xf32> to vector<8x256xf32>
    %69 = arith.mulf %66, %68 : vector<8x256xf32>
    %70 = arith.truncf %69 : vector<8x256xf32> to vector<8x256xbf16>
    %c16_36 = arith.constant 16 : index
    %c256_37 = arith.constant 256 : index
    %71 = vector.load %arg5[%c16_36, %c256_37] : memref<72x512xbf16, #tpu.memory_space<vmem>>, vector<8x256xbf16>
    tpu.vector_store %arg5[%c16_36, %c256_37], %70 {strides = array<i32>} : memref<72x512xbf16, #tpu.memory_space<vmem>>, vector<8x256xbf16>,
    %c1_i32_38 = arith.constant 1 : i32
    %72 = tpu.dynamic_rotate %53 by %c1_i32_38 dim 1 : vector<8x256xf32>, i32 -> vector<8x256xf32>
    %c3_39 = arith.constant 3 : index
    %c0_40 = arith.constant 0 : index
    %73 = vector.load %arg1[%c3_39, %c0_40] : memref<8x256xf32, #tpu.memory_space<vmem>>, vector<1x256xf32>
    %74 = vector.broadcast %73 : vector<1x256xf32> to vector<8x256xf32>
    %75 = arith.mulf %72, %74 : vector<8x256xf32>
    %76 = arith.truncf %75 : vector<8x256xf32> to vector<8x256xbf16>
    %c24_41 = arith.constant 24 : index
    %c256_42 = arith.constant 256 : index
    %77 = vector.load %arg5[%c24_41, %c256_42] : memref<72x512xbf16, #tpu.memory_space<vmem>>, vector<8x256xbf16>
    tpu.vector_store %arg5[%c24_41, %c256_42], %76 {strides = array<i32>} : memref<72x512xbf16, #tpu.memory_space<vmem>>, vector<8x256xbf16>,
    %78 = arith.truncf %53 : vector<8x256xf32> to vector<8x256xbf16>
    %c32_43 = arith.constant 32 : index
    %c256_44 = arith.constant 256 : index
    %79 = vector.load %arg5[%c32_43, %c256_44] : memref<72x512xbf16, #tpu.memory_space<vmem>>, vector<8x256xbf16>
    tpu.vector_store %arg5[%c32_43, %c256_44], %78 {strides = array<i32>} : memref<72x512xbf16, #tpu.memory_space<vmem>>, vector<8x256xbf16>,
    %c255_i32_45 = arith.constant 255 : i32
    %80 = tpu.dynamic_rotate %53 by %c255_i32_45 dim 1 : vector<8x256xf32>, i32 -> vector<8x256xf32>
    %c4_46 = arith.constant 4 : index
    %c0_47 = arith.constant 0 : index
    %81 = vector.load %arg1[%c4_46, %c0_47] : memref<8x256xf32, #tpu.memory_space<vmem>>, vector<1x256xf32>
    %82 = vector.broadcast %81 : vector<1x256xf32> to vector<8x256xf32>
    %83 = arith.mulf %80, %82 : vector<8x256xf32>
    %84 = arith.truncf %83 : vector<8x256xf32> to vector<8x256xbf16>
    %c40_48 = arith.constant 40 : index
    %c256_49 = arith.constant 256 : index
    %85 = vector.load %arg5[%c40_48, %c256_49] : memref<72x512xbf16, #tpu.memory_space<vmem>>, vector<8x256xbf16>
    tpu.vector_store %arg5[%c40_48, %c256_49], %84 {strides = array<i32>} : memref<72x512xbf16, #tpu.memory_space<vmem>>, vector<8x256xbf16>,
    %c241_i32_50 = arith.constant 241 : i32
    %86 = tpu.dynamic_rotate %53 by %c241_i32_50 dim 1 : vector<8x256xf32>, i32 -> vector<8x256xf32>
    %c5_51 = arith.constant 5 : index
    %c0_52 = arith.constant 0 : index
    %87 = vector.load %arg1[%c5_51, %c0_52] : memref<8x256xf32, #tpu.memory_space<vmem>>, vector<1x256xf32>
    %88 = vector.broadcast %87 : vector<1x256xf32> to vector<8x256xf32>
    %89 = arith.mulf %86, %88 : vector<8x256xf32>
    %90 = arith.truncf %89 : vector<8x256xf32> to vector<8x256xbf16>
    %c48_53 = arith.constant 48 : index
    %c256_54 = arith.constant 256 : index
    %91 = vector.load %arg5[%c48_53, %c256_54] : memref<72x512xbf16, #tpu.memory_space<vmem>>, vector<8x256xbf16>
    tpu.vector_store %arg5[%c48_53, %c256_54], %90 {strides = array<i32>} : memref<72x512xbf16, #tpu.memory_space<vmem>>, vector<8x256xbf16>,
    %c240_i32_55 = arith.constant 240 : i32
    %92 = tpu.dynamic_rotate %53 by %c240_i32_55 dim 1 : vector<8x256xf32>, i32 -> vector<8x256xf32>
    %c6_56 = arith.constant 6 : index
    %c0_57 = arith.constant 0 : index
    %93 = vector.load %arg1[%c6_56, %c0_57] : memref<8x256xf32, #tpu.memory_space<vmem>>, vector<1x256xf32>
    %94 = vector.broadcast %93 : vector<1x256xf32> to vector<8x256xf32>
    %95 = arith.mulf %92, %94 : vector<8x256xf32>
    %96 = arith.truncf %95 : vector<8x256xf32> to vector<8x256xbf16>
    %c56_58 = arith.constant 56 : index
    %c256_59 = arith.constant 256 : index
    %97 = vector.load %arg5[%c56_58, %c256_59] : memref<72x512xbf16, #tpu.memory_space<vmem>>, vector<8x256xbf16>
    tpu.vector_store %arg5[%c56_58, %c256_59], %96 {strides = array<i32>} : memref<72x512xbf16, #tpu.memory_space<vmem>>, vector<8x256xbf16>,
    %c239_i32_60 = arith.constant 239 : i32
    %98 = tpu.dynamic_rotate %53 by %c239_i32_60 dim 1 : vector<8x256xf32>, i32 -> vector<8x256xf32>
    %c7_61 = arith.constant 7 : index
    %c0_62 = arith.constant 0 : index
    %99 = vector.load %arg1[%c7_61, %c0_62] : memref<8x256xf32, #tpu.memory_space<vmem>>, vector<1x256xf32>
    %100 = vector.broadcast %99 : vector<1x256xf32> to vector<8x256xf32>
    %101 = arith.mulf %98, %100 : vector<8x256xf32>
    %102 = arith.truncf %101 : vector<8x256xf32> to vector<8x256xbf16>
    %c64_63 = arith.constant 64 : index
    %c256_64 = arith.constant 256 : index
    %103 = vector.load %arg5[%c64_63, %c256_64] : memref<72x512xbf16, #tpu.memory_space<vmem>>, vector<8x256xbf16>
    tpu.vector_store %arg5[%c64_63, %c256_64], %102 {strides = array<i32>} : memref<72x512xbf16, #tpu.memory_space<vmem>>, vector<8x256xbf16>,
    %c0_65 = arith.constant 0 : index
    %c0_66 = arith.constant 0 : index
    %104 = vector.load %arg3[%c0_65, %c0_66] : memref<24x72xbf16, #tpu.memory_space<vmem>>, vector<24x72xbf16>
    %c0_67 = arith.constant 0 : index
    %c0_68 = arith.constant 0 : index
    %105 = vector.load %arg5[%c0_67, %c0_68] : memref<72x512xbf16, #tpu.memory_space<vmem>>, vector<72x512xbf16>
    %cst = arith.constant dense<0.000000e+00> : vector<24x512xf32>
    %106 = tpu.matmul %104, %105, %cst {dimension_numbers = #tpu.dot_dimension_numbers<[1], [0], [0], [1], [0, 0, 1, 1], [], []>} : vector<24x72xbf16>, vector<72x512xbf16>, vector<24x512xf32> -> vector<24x512xf32>
    %107 = vector.extract_strided_slice %106 {offsets = [0, 0], sizes = [24, 256], strides = [1, 1]} : vector<24x512xf32> to vector<24x256xf32>
    %cst_69 = arith.constant dense<0.000000e+00> : vector<24xf32>
    %108 = vector.multi_reduction <add>, %107, %cst_69 [1] : vector<24x256xf32> to vector<24xf32>
    %109 = vector.shape_cast %108 : vector<24xf32> to vector<24x1xf32>
    %cst_70 = arith.constant 3.906250e-03 : f32
    %110 = vector.broadcast %cst_70 : f32 to vector<24x1xf32>
    %111 = arith.mulf %109, %110 : vector<24x1xf32>
    %112 = arith.mulf %107, %107 : vector<24x256xf32>
    %cst_71 = arith.constant dense<0.000000e+00> : vector<24xf32>
    %113 = vector.multi_reduction <add>, %112, %cst_71 [1] : vector<24x256xf32> to vector<24xf32>
    %114 = vector.shape_cast %113 : vector<24xf32> to vector<24x1xf32>
    %cst_72 = arith.constant 3.906250e-03 : f32
    %115 = vector.broadcast %cst_72 : f32 to vector<24x1xf32>
    %116 = arith.mulf %114, %115 : vector<24x1xf32>
    %117 = arith.mulf %111, %111 : vector<24x1xf32>
    %118 = arith.subf %116, %117 : vector<24x1xf32>
    %cst_73 = arith.constant 0.000000e+00 : f32
    %119 = vector.broadcast %cst_73 : f32 to vector<24x1xf32>
    %120 = arith.maximumf %118, %119 : vector<24x1xf32>
    %cst_74 = arith.constant 9.99999974E-6 : f32
    %121 = vector.broadcast %cst_74 : f32 to vector<24x1xf32>
    %122 = arith.addf %120, %121 : vector<24x1xf32>
    %123 = math.rsqrt %122 : vector<24x1xf32>
    %cst_75 = arith.constant 0.333333343 : f32
    %124 = vector.broadcast %cst_75 : f32 to vector<24x1xf32>
    %125 = arith.mulf %123, %124 : vector<24x1xf32>
    %126 = vector.broadcast %111 : vector<24x1xf32> to vector<24x256xf32>
    %127 = arith.subf %107, %126 : vector<24x256xf32>
    %128 = vector.broadcast %125 : vector<24x1xf32> to vector<24x256xf32>
    %129 = arith.mulf %127, %128 : vector<24x256xf32>
    %cst_76 = arith.constant 2.000000e-01 : f32
    %130 = vector.broadcast %cst_76 : f32 to vector<24x256xf32>
    %131 = arith.mulf %130, %129 : vector<24x256xf32>
    %132 = arith.maximumf %129, %131 : vector<24x256xf32>
    %133 = vector.extract_strided_slice %132 {offsets = [0, 0], sizes = [8, 256], strides = [1, 1]} : vector<24x256xf32> to vector<8x256xf32>
    %134 = vector.extract_strided_slice %132 {offsets = [8, 0], sizes = [8, 256], strides = [1, 1]} : vector<24x256xf32> to vector<8x256xf32>
    %135 = arith.addf %133, %134 : vector<8x256xf32>
    %136 = vector.extract_strided_slice %132 {offsets = [16, 0], sizes = [8, 256], strides = [1, 1]} : vector<24x256xf32> to vector<8x256xf32>
    %137 = arith.addf %135, %136 : vector<8x256xf32>
    %c0_77 = arith.constant 0 : index
    %c0_78 = arith.constant 0 : index
    %c0_79 = arith.constant 0 : index
    %138 = vector.load %arg4[%c0_77, %c0_78, %c0_79] : memref<2x8x256xf32, #tpu.memory_space<vmem>>, vector<1x8x256xf32>
    %139 = vector.shape_cast %138 : vector<1x8x256xf32> to vector<8x256xf32>
    %140 = vector.shape_cast %137 : vector<8x256xf32> to vector<1x8x256xf32>
    tpu.vector_store %arg4[%c0_77, %c0_78, %c0_79], %140 {strides = array<i32>} : memref<2x8x256xf32, #tpu.memory_space<vmem>>, vector<1x8x256xf32>,
    %141 = vector.extract_strided_slice %106 {offsets = [0, 256], sizes = [24, 256], strides = [1, 1]} : vector<24x512xf32> to vector<24x256xf32>
    %cst_80 = arith.constant dense<0.000000e+00> : vector<24xf32>
    %142 = vector.multi_reduction <add>, %141, %cst_80 [1] : vector<24x256xf32> to vector<24xf32>
    %143 = vector.shape_cast %142 : vector<24xf32> to vector<24x1xf32>
    %cst_81 = arith.constant 3.906250e-03 : f32
    %144 = vector.broadcast %cst_81 : f32 to vector<24x1xf32>
    %145 = arith.mulf %143, %144 : vector<24x1xf32>
    %146 = arith.mulf %141, %141 : vector<24x256xf32>
    %cst_82 = arith.constant dense<0.000000e+00> : vector<24xf32>
    %147 = vector.multi_reduction <add>, %146, %cst_82 [1] : vector<24x256xf32> to vector<24xf32>
    %148 = vector.shape_cast %147 : vector<24xf32> to vector<24x1xf32>
    %cst_83 = arith.constant 3.906250e-03 : f32
    %149 = vector.broadcast %cst_83 : f32 to vector<24x1xf32>
    %150 = arith.mulf %148, %149 : vector<24x1xf32>
    %151 = arith.mulf %145, %145 : vector<24x1xf32>
    %152 = arith.subf %150, %151 : vector<24x1xf32>
    %cst_84 = arith.constant 0.000000e+00 : f32
    %153 = vector.broadcast %cst_84 : f32 to vector<24x1xf32>
    %154 = arith.maximumf %152, %153 : vector<24x1xf32>
    %cst_85 = arith.constant 9.99999974E-6 : f32
    %155 = vector.broadcast %cst_85 : f32 to vector<24x1xf32>
    %156 = arith.addf %154, %155 : vector<24x1xf32>
    %157 = math.rsqrt %156 : vector<24x1xf32>
    %cst_86 = arith.constant 0.333333343 : f32
    %158 = vector.broadcast %cst_86 : f32 to vector<24x1xf32>
    %159 = arith.mulf %157, %158 : vector<24x1xf32>
    %160 = vector.broadcast %145 : vector<24x1xf32> to vector<24x256xf32>
    %161 = arith.subf %141, %160 : vector<24x256xf32>
    %162 = vector.broadcast %159 : vector<24x1xf32> to vector<24x256xf32>
    %163 = arith.mulf %161, %162 : vector<24x256xf32>
    %cst_87 = arith.constant 2.000000e-01 : f32
    %164 = vector.broadcast %cst_87 : f32 to vector<24x256xf32>
    %165 = arith.mulf %164, %163 : vector<24x256xf32>
    %166 = arith.maximumf %163, %165 : vector<24x256xf32>
    %167 = vector.extract_strided_slice %166 {offsets = [0, 0], sizes = [8, 256], strides = [1, 1]} : vector<24x256xf32> to vector<8x256xf32>
    %168 = vector.extract_strided_slice %166 {offsets = [8, 0], sizes = [8, 256], strides = [1, 1]} : vector<24x256xf32> to vector<8x256xf32>
    %169 = arith.addf %167, %168 : vector<8x256xf32>
    %170 = vector.extract_strided_slice %166 {offsets = [16, 0], sizes = [8, 256], strides = [1, 1]} : vector<24x256xf32> to vector<8x256xf32>
    %171 = arith.addf %169, %170 : vector<8x256xf32>
    %c1_88 = arith.constant 1 : index
    %c0_89 = arith.constant 0 : index
    %c0_90 = arith.constant 0 : index
    %172 = vector.load %arg4[%c1_88, %c0_89, %c0_90] : memref<2x8x256xf32, #tpu.memory_space<vmem>>, vector<1x8x256xf32>
    %173 = vector.shape_cast %172 : vector<1x8x256xf32> to vector<8x256xf32>
    %174 = vector.shape_cast %171 : vector<8x256xf32> to vector<1x8x256xf32>
    tpu.vector_store %arg4[%c1_88, %c0_89, %c0_90], %174 {strides = array<i32>} : memref<2x8x256xf32, #tpu.memory_space<vmem>>, vector<1x8x256xf32>,
    return
  }
  func.func @transform_0(%arg0: i32) -> (i32, i32) {
    %c0_i32 = arith.constant 0 : i32
    %c0_i32_0 = arith.constant 0 : i32
    %c0_i32_1 = arith.constant 0 : i32
    return %c0_i32, %c0_i32_0 : i32, i32
  }
  func.func @transform_1(%arg0: i32) -> (i32, i32, i32) {
    %c0_i32 = arith.constant 0 : i32
    %c0_i32_0 = arith.constant 0 : i32
    %c0_i32_1 = arith.constant 0 : i32
    return %arg0, %c0_i32, %c0_i32_0 : i32, i32, i32
  }
  func.func @transform_2(%arg0: i32) -> (i32, i32) {
    %c0_i32 = arith.constant 0 : i32
    %c0_i32_0 = arith.constant 0 : i32
    %c0_i32_1 = arith.constant 0 : i32
    return %c0_i32, %c0_i32_0 : i32, i32
  }
  func.func @transform_3(%arg0: i32) -> (i32, i32, i32) {
    %c0_i32 = arith.constant 0 : i32
    %c0_i32_0 = arith.constant 0 : i32
    %c0_i32_1 = arith.constant 0 : i32
    return %arg0, %c0_i32, %c0_i32_0 : i32, i32, i32
  }
}

</mosaic_0001>

<llo_original>
// kernel: tpu_custom_call.1
$region0: #{tpu_custom_call.1}
  #allocation0 [shape = 'u32[]', space=smem, size = 0x4, offset = 0x4, fixed_abs, tag = 'smem constant byte address 0x4 - core index']
  #allocation1 [shape = 'u32[144,128]{1,0:T(1,128)}', space=vmem, size = 0x12000, scoped, tag = 'internal scratch']
  #allocation2 [shape = 'bf16[72,512]{1,0:T(8,128)(2,1)}', space=vmem, size = 0x12000, scoped, tag = 'scratch operand']
  %s0 = inlined_call_operand.hbm [shape: f32[8,256], index: 0, kind: input, shape index: {}]
  %s1 = inlined_call_operand.hbm [shape: f32[2,8,256], index: 1, kind: input, shape index: {}]
  %s2 = inlined_call_operand.hbm [shape: bf16[24,72], index: 2, kind: input, shape index: {}]
  %s3 = inlined_call_operand.hbm [shape: f32[2,8,256], index: 3, kind: output, shape index: {}]
  %s4 = sld [smem:[#allocation0]]
  $region34: #{tpu_custom_call.1} parent=0
    _
  %s6 = ssub.s32 1, %s4
  %s7 = scalar_select 0, %s6, %s4
  $region1: #{tpu_custom_call.1} parent=0
    #allocation3 [shape = 'u8[8192]{0}', space=vmem, size = 0x2000, scoped, tag = 'input window, operand 0, single buffered']
    #allocation4 [shape = 's32[1]{0}', space=sflag, size = 0x4, scoped, tag = 'scoped memory for tpu_custom_call.1']
    #allocation5 [shape = 's32[1]{0}', space=sflag, size = 0x4, scoped, tag = 'scoped memory for tpu_custom_call.1']
    #allocation6 [shape = 'u8[16384]{0}', space=vmem, size = 0x4000, scoped, tag = 'input window, operand 1, single buffered']
    #allocation7 [shape = 's32[1]{0}', space=sflag, size = 0x4, scoped, tag = 'scoped memory for tpu_custom_call.1']
    #allocation8 [shape = 'u8[6144]{0}', space=vmem, size = 0x1800, scoped, tag = 'input window, operand 2, single buffered']
    #allocation9 [shape = 'u8[16384]{0}', space=vmem, size = 0x4000, scoped, tag = 'output window, operand 0, single buffered']
    %8 = vsyncpa [#allocation4], 0
    %9 = vsyncpa [#allocation7], 0
    %10 = vsyncpa [#allocation5], 0
    // Predicated region
    $region2: #{tpu_custom_call.1} parent=1 // pred_check
      _
    $region3: #{tpu_custom_call.1} parent=1 // pred_check_branch
      %12 = sbr.rel (0) target = $region5
    $region4: #{tpu_custom_call.1} parent=1 // pred_region
      %s14 = ssub.s32 256, 256
      %15 = vsyncadd [#allocation4], %s14
      %s17 = sshll.u32 [#allocation3], 4
      %s18 = int_to_ptr.vmem [resolvable:$true] %s17
      %20 = dma.hbm_to_vmem [thread:$0]  %s0, 256, %s18, [#allocation4]
    $region5: #{tpu_custom_call.1} parent=1 // pred_fallthru
      _
    // Predicated region
    $region6: #{tpu_custom_call.1} parent=1 // pred_check
      _
    $region7: #{tpu_custom_call.1} parent=1 // pred_check_branch
      %22 = sbr.rel (0) target = $region9
    $region8: #{tpu_custom_call.1} parent=1 // pred_region
      %s24 = ssub.s32 512, 512
      %25 = vsyncadd [#allocation7], %s24
      %s26 = sshll.u32 [#allocation6], 4
      %s27 = int_to_ptr.vmem [resolvable:$true] %s26
      %32 = dma.hbm_to_vmem [thread:$0]  %s1, 512, %s27, [#allocation7], 256, 256, 16
    $region9: #{tpu_custom_call.1} parent=1 // pred_fallthru
      _
    // Predicated region
    $region10: #{tpu_custom_call.1} parent=1 // pred_check
      _
    $region11: #{tpu_custom_call.1} parent=1 // pred_check_branch
      %34 = sbr.rel (0) target = $region13
    $region12: #{tpu_custom_call.1} parent=1 // pred_region
      %s36 = ssub.s32 192, 192
      %37 = vsyncadd [#allocation7], %s36
      %s38 = sshll.u32 [#allocation8], 4
      %s39 = int_to_ptr.vmem [resolvable:$true] %s38
      %44 = dma.hbm_to_vmem [thread:$0]  %s2, 192, %s39, [#allocation7], 64, 64, 4
    $region13: #{tpu_custom_call.1} parent=1 // pred_fallthru
      _
    // Predicated region
    $region14: #{tpu_custom_call.1} parent=1 // pred_check
      _
    $region15: #{tpu_custom_call.1} parent=1 // pred_check_branch
      %46 = sbr.rel (0) target = $region17
    $region16: #{tpu_custom_call.1} parent=1 // pred_region
      %47 = dma.done [#allocation4], 256
    $region17: #{tpu_custom_call.1} parent=1 // pred_fallthru
      _
    // Predicated region
    $region18: #{tpu_custom_call.1} parent=1 // pred_check
      _
    $region19: #{tpu_custom_call.1} parent=1 // pred_check_branch
      %49 = sbr.rel (0) target = $region21
    $region20: #{tpu_custom_call.1} parent=1 // pred_region
      %50 = dma.done [#allocation7], 512
    $region21: #{tpu_custom_call.1} parent=1 // pred_fallthru
      _
    // Predicated region
    $region22: #{tpu_custom_call.1} parent=1 // pred_check
      _
    $region23: #{tpu_custom_call.1} parent=1 // pred_check_branch
      %52 = sbr.rel (0) target = $region25
    $region24: #{tpu_custom_call.1} parent=1 // pred_region
      %53 = dma.done [#allocation7], 192
    $region25: #{tpu_custom_call.1} parent=1 // pred_fallthru
      _
    %v55 = vld [vmem:[#allocation6] sm:$0xff]
    %v56 = vld [vmem:[#allocation6 + $0x8] sm:$0xff]
    %57 = vrot.lane.b32.xlu0 %v55, 17
    %v58 = vpop.permute.xlu0 %57
    %59 = vrot.lane.b32.xlu0 %v56, 17
    %v60 = vpop.permute.xlu0 %59
    %v61 = vlaneseq
    %v62 = vand.u32 %v61, 127
    %vm63 = vcmp.lt.s32.totalorder %v62, 17
    %v64 = vsel %vm63, %v58, %v60
    %v65 = vsel %vm63, %v60, %v58
    %v66 = vld [vmem:[#allocation3] ss:$8 sm:$0x3]
    %v68 = vlaneseq
    %v69 = vshrl.u32 %v68, 7
    %v70 = vsub.s32 0, %v69
    %v71 = vrot.slane %v66, %v70
    %v72 = vlaneseq
    %v73 = vshrl.u32 %v72, 7
    %v74 = vsub.s32 1, %v73
    %v75 = vrot.slane %v66, %v74
    %v78 = vmul.f32 %v65, %v71
    %v79 = vmul.f32 %v64, %v75
    %v80 = vpack.c.bf16 %v78, %v78
    %v81 = vpack.c.bf16 %v79, %v79
    %v84 = vunpack.c.l.b16 %v80
    %v85 = vunpack.c.l.b16 %v81
    %v86 = vpack.c.b16 %v85, %v84
    %88 = vst [vmem:[#allocation2] sm:$0xff] %v86
    %89 = vrot.lane.b32.xlu0 %v55, 16
    %v90 = vpop.permute.xlu0 %89
    %91 = vrot.lane.b32.xlu0 %v56, 16
    %v92 = vpop.permute.xlu0 %91
    %vm93 = vcmp.lt.s32.totalorder %v62, 16
    %v94 = vsel %vm93, %v90, %v92
    %v95 = vsel %vm93, %v92, %v90
    %s96 = scalar_lea.vmem [#allocation3], 1
    %v97 = vld [vmem:[%s96] ss:$8 sm:$0x3]
    %v99 = vlaneseq
    %v100 = vshrl.u32 %v99, 7
    %v101 = vsub.s32 0, %v100
    %v102 = vrot.slane %v97, %v101
    %v103 = vlaneseq
    %v104 = vshrl.u32 %v103, 7
    %v105 = vsub.s32 1, %v104
    %v106 = vrot.slane %v97, %v105
    %v109 = vmul.f32 %v95, %v102
    %v110 = vmul.f32 %v94, %v106
    %v111 = vpack.c.bf16 %v109, %v109
    %v112 = vpack.c.bf16 %v110, %v110
    %v115 = vunpack.c.l.b16 %v111
    %v116 = vunpack.c.l.b16 %v112
    %v117 = vpack.c.b16 %v116, %v115
    %119 = vst [vmem:[#allocation2 + $0x10] sm:$0xff] %v117
    %120 = vrot.lane.b32.xlu0 %v55, 15
    %v121 = vpop.permute.xlu0 %120
    %122 = vrot.lane.b32.xlu0 %v56, 15
    %v123 = vpop.permute.xlu0 %122
    %vm124 = vcmp.lt.s32.totalorder %v62, 15
    %v125 = vsel %vm124, %v121, %v123
    %v126 = vsel %vm124, %v123, %v121
    %s127 = scalar_lea.vmem [#allocation3], 2
    %v128 = vld [vmem:[%s127] ss:$8 sm:$0x3]
    %v130 = vlaneseq
    %v131 = vshrl.u32 %v130, 7
    %v132 = vsub.s32 0, %v131
    %v133 = vrot.slane %v128, %v132
    %v134 = vlaneseq
    %v135 = vshrl.u32 %v134, 7
    %v136 = vsub.s32 1, %v135
    %v137 = vrot.slane %v128, %v136
    %v140 = vmul.f32 %v126, %v133
    %v141 = vmul.f32 %v125, %v137
    %v142 = vpack.c.bf16 %v140, %v140
    %v143 = vpack.c.bf16 %v141, %v141
    %v146 = vunpack.c.l.b16 %v142
    %v147 = vunpack.c.l.b16 %v143
    %v148 = vpack.c.b16 %v147, %v146
    %150 = vst [vmem:[#allocation2 + $0x20] sm:$0xff] %v148
    %151 = vrot.lane.b32.xlu0 %v55, 1
    %v152 = vpop.permute.xlu0 %151
    %153 = vrot.lane.b32.xlu0 %v56, 1
    %v154 = vpop.permute.xlu0 %153
    %vm155 = vcmp.lt.s32.totalorder %v62, 1
    %v156 = vsel %vm155, %v152, %v154
    %v157 = vsel %vm155, %v154, %v152
    %s158 = scalar_lea.vmem [#allocation3], 3
    %v159 = vld [vmem:[%s158] ss:$8 sm:$0x3]
    %v161 = vlaneseq
    %v162 = vshrl.u32 %v161, 7
    %v163 = vsub.s32 0, %v162
    %v164 = vrot.slane %v159, %v163
    %v165 = vlaneseq
    %v166 = vshrl.u32 %v165, 7
    %v167 = vsub.s32 1, %v166
    %v168 = vrot.slane %v159, %v167
    %v171 = vmul.f32 %v157, %v164
    %v172 = vmul.f32 %v156, %v168
    %v173 = vpack.c.bf16 %v171, %v171
    %v174 = vpack.c.bf16 %v172, %v172
    %v177 = vunpack.c.l.b16 %v173
    %v178 = vunpack.c.l.b16 %v174
    %v179 = vpack.c.b16 %v178, %v177
    %181 = vst [vmem:[#allocation2 + $0x30] sm:$0xff] %v179
    %v182 = vpack.c.bf16 %v55, %v55
    %v183 = vpack.c.bf16 %v56, %v56
    %v186 = vunpack.c.l.b16 %v182
    %v187 = vunpack.c.l.b16 %v183
    %v188 = vpack.c.b16 %v187, %v186
    %190 = vst [vmem:[#allocation2 + $0x40] sm:$0xff] %v188
    %191 = vrot.lane.b32.xlu0 %v55, 127
    %v192 = vpop.permute.xlu0 %191
    %193 = vrot.lane.b32.xlu0 %v56, 127
    %v194 = vpop.permute.xlu0 %193
    %vm195 = vcmp.lt.s32.totalorder %v62, 127
    %v196 = vsel %vm195, %v192, %v194
    %v197 = vsel %vm195, %v194, %v192
    %s198 = scalar_lea.vmem [#allocation3], 4
    %v199 = vld [vmem:[%s198] ss:$8 sm:$0x3]
    %v201 = vlaneseq
    %v202 = vshrl.u32 %v201, 7
    %v203 = vsub.s32 0, %v202
    %v204 = vrot.slane %v199, %v203
    %v205 = vlaneseq
    %v206 = vshrl.u32 %v205, 7
    %v207 = vsub.s32 1, %v206
    %v208 = vrot.slane %v199, %v207
    %v211 = vmul.f32 %v196, %v204
    %v212 = vmul.f32 %v197, %v208
    %v213 = vpack.c.bf16 %v211, %v211
    %v214 = vpack.c.bf16 %v212, %v212
    %v217 = vunpack.c.l.b16 %v213
    %v218 = vunpack.c.l.b16 %v214
    %v219 = vpack.c.b16 %v218, %v217
    %221 = vst [vmem:[#allocation2 + $0x50] sm:$0xff] %v219
    %222 = vrot.lane.b32.xlu0 %v55, 113
    %v223 = vpop.permute.xlu0 %222
    %224 = vrot.lane.b32.xlu0 %v56, 113
    %v225 = vpop.permute.xlu0 %224
    %vm226 = vcmp.lt.s32.totalorder %v62, 113
    %v227 = vsel %vm226, %v223, %v225
    %v228 = vsel %vm226, %v225, %v223
    %s229 = scalar_lea.vmem [#allocation3], 5
    %v230 = vld [vmem:[%s229] ss:$8 sm:$0x3]
    %v232 = vlaneseq
    %v233 = vshrl.u32 %v232, 7
    %v234 = vsub.s32 0, %v233
    %v235 = vrot.slane %v230, %v234
    %v236 = vlaneseq
    %v237 = vshrl.u32 %v236, 7
    %v238 = vsub.s32 1, %v237
    %v239 = vrot.slane %v230, %v238
    %v242 = vmul.f32 %v227, %v235
    %v243 = vmul.f32 %v228, %v239
    %v244 = vpack.c.bf16 %v242, %v242
    %v245 = vpack.c.bf16 %v243, %v243
    %v248 = vunpack.c.l.b16 %v244
    %v249 = vunpack.c.l.b16 %v245
    %v250 = vpack.c.b16 %v249, %v248
    %252 = vst [vmem:[#allocation2 + $0x60] sm:$0xff] %v250
    %253 = vrot.lane.b32.xlu0 %v55, 112
    %v254 = vpop.permute.xlu0 %253
    %255 = vrot.lane.b32.xlu0 %v56, 112
    %v256 = vpop.permute.xlu0 %255
    %vm257 = vcmp.lt.s32.totalorder %v62, 112
    %v258 = vsel %vm257, %v254, %v256
    %v259 = vsel %vm257, %v256, %v254
    %s260 = scalar_lea.vmem [#allocation3], 6
    %v261 = vld [vmem:[%s260] ss:$8 sm:$0x3]
    %v263 = vlaneseq
    %v264 = vshrl.u32 %v263, 7
    %v265 = vsub.s32 0, %v264
    %v266 = vrot.slane %v261, %v265
    %v267 = vlaneseq
    %v268 = vshrl.u32 %v267, 7
    %v269 = vsub.s32 1, %v268
    %v270 = vrot.slane %v261, %v269
    %v273 = vmul.f32 %v258, %v266
    %v274 = vmul.f32 %v259, %v270
    %v275 = vpack.c.bf16 %v273, %v273
    %v276 = vpack.c.bf16 %v274, %v274
    %v279 = vunpack.c.l.b16 %v275
    %v280 = vunpack.c.l.b16 %v276
    %v281 = vpack.c.b16 %v280, %v279
    %283 = vst [vmem:[#allocation2 + $0x70] sm:$0xff] %v281
    %284 = vrot.lane.b32.xlu0 %v55, 111
    %v285 = vpop.permute.xlu0 %284
    %286 = vrot.lane.b32.xlu0 %v56, 111
    %v287 = vpop.permute.xlu0 %286
    %vm288 = vcmp.lt.s32.totalorder %v62, 111
    %v289 = vsel %vm288, %v285, %v287
    %v290 = vsel %vm288, %v287, %v285
    %s291 = scalar_lea.vmem [#allocation3], 7
    %v292 = vld [vmem:[%s291] ss:$8 sm:$0x3]
    %v294 = vlaneseq
    %v295 = vshrl.u32 %v294, 7
    %v296 = vsub.s32 0, %v295
    %v297 = vrot.slane %v292, %v296
    %v298 = vlaneseq
    %v299 = vshrl.u32 %v298, 7
    %v300 = vsub.s32 1, %v299
    %v301 = vrot.slane %v292, %v300
    %v304 = vmul.f32 %v289, %v297
    %v305 = vmul.f32 %v290, %v301
    %v306 = vpack.c.bf16 %v304, %v304
    %v307 = vpack.c.bf16 %v305, %v305
    %v310 = vunpack.c.l.b16 %v306
    %v311 = vunpack.c.l.b16 %v307
    %v312 = vpack.c.b16 %v311, %v310
    %314 = vst [vmem:[#allocation2 + $0x80] sm:$0xff] %v312
    %s315 = scalar_lea.vmem [#allocation6], 16
    %v316 = vld [vmem:[%s315] sm:$0xff]
    %v317 = vld [vmem:[%s315 + $0x8] sm:$0xff]
    %318 = vrot.lane.b32.xlu0 %v316, 17
    %v319 = vpop.permute.xlu0 %318
    %320 = vrot.lane.b32.xlu0 %v317, 17
    %v321 = vpop.permute.xlu0 %320
    %v322 = vsel %vm63, %v319, %v321
    %v323 = vsel %vm63, %v321, %v319
    %v324 = vld [vmem:[#allocation3] ss:$8 sm:$0x3]
    %v326 = vlaneseq
    %v327 = vshrl.u32 %v326, 7
    %v328 = vsub.s32 0, %v327
    %v329 = vrot.slane %v324, %v328
    %v330 = vlaneseq
    %v331 = vshrl.u32 %v330, 7
    %v332 = vsub.s32 1, %v331
    %v333 = vrot.slane %v324, %v332
    %v336 = vmul.f32 %v323, %v329
    %v337 = vmul.f32 %v322, %v333
    %v338 = vpack.c.bf16 %v336, %v336
    %v339 = vpack.c.bf16 %v337, %v337
    %v342 = vunpack.c.l.b16 %v338
    %v343 = vunpack.c.l.b16 %v339
    %v344 = vpack.c.b16 %v343, %v342
    %346 = vst [vmem:[#allocation2 + $0x8] sm:$0xff] %v344
    %347 = vrot.lane.b32.xlu0 %v316, 16
    %v348 = vpop.permute.xlu0 %347
    %349 = vrot.lane.b32.xlu0 %v317, 16
    %v350 = vpop.permute.xlu0 %349
    %v351 = vsel %vm93, %v348, %v350
    %v352 = vsel %vm93, %v350, %v348
    %v353 = vld [vmem:[%s96] ss:$8 sm:$0x3]
    %v355 = vlaneseq
    %v356 = vshrl.u32 %v355, 7
    %v357 = vsub.s32 0, %v356
    %v358 = vrot.slane %v353, %v357
    %v359 = vlaneseq
    %v360 = vshrl.u32 %v359, 7
    %v361 = vsub.s32 1, %v360
    %v362 = vrot.slane %v353, %v361
    %v365 = vmul.f32 %v352, %v358
    %v366 = vmul.f32 %v351, %v362
    %v367 = vpack.c.bf16 %v365, %v365
    %v368 = vpack.c.bf16 %v366, %v366
    %v371 = vunpack.c.l.b16 %v367
    %v372 = vunpack.c.l.b16 %v368
    %v373 = vpack.c.b16 %v372, %v371
    %375 = vst [vmem:[#allocation2 + $0x18] sm:$0xff] %v373
    %376 = vrot.lane.b32.xlu0 %v316, 15
    %v377 = vpop.permute.xlu0 %376
    %378 = vrot.lane.b32.xlu0 %v317, 15
    %v379 = vpop.permute.xlu0 %378
    %v380 = vsel %vm124, %v377, %v379
    %v381 = vsel %vm124, %v379, %v377
    %v382 = vld [vmem:[%s127] ss:$8 sm:$0x3]
    %v384 = vlaneseq
    %v385 = vshrl.u32 %v384, 7
    %v386 = vsub.s32 0, %v385
    %v387 = vrot.slane %v382, %v386
    %v388 = vlaneseq
    %v389 = vshrl.u32 %v388, 7
    %v390 = vsub.s32 1, %v389
    %v391 = vrot.slane %v382, %v390
    %v394 = vmul.f32 %v381, %v387
    %v395 = vmul.f32 %v380, %v391
    %v396 = vpack.c.bf16 %v394, %v394
    %v397 = vpack.c.bf16 %v395, %v395
    %v400 = vunpack.c.l.b16 %v396
    %v401 = vunpack.c.l.b16 %v397
    %v402 = vpack.c.b16 %v401, %v400
    %404 = vst [vmem:[#allocation2 + $0x28] sm:$0xff] %v402
    %405 = vrot.lane.b32.xlu0 %v316, 1
    %v406 = vpop.permute.xlu0 %405
    %407 = vrot.lane.b32.xlu0 %v317, 1
    %v408 = vpop.permute.xlu0 %407
    %v409 = vsel %vm155, %v406, %v408
    %v410 = vsel %vm155, %v408, %v406
    %v411 = vld [vmem:[%s158] ss:$8 sm:$0x3]
    %v413 = vlaneseq
    %v414 = vshrl.u32 %v413, 7
    %v415 = vsub.s32 0, %v414
    %v416 = vrot.slane %v411, %v415
    %v417 = vlaneseq
    %v418 = vshrl.u32 %v417, 7
    %v419 = vsub.s32 1, %v418
    %v420 = vrot.slane %v411, %v419
    %v423 = vmul.f32 %v410, %v416
    %v424 = vmul.f32 %v409, %v420
    %v425 = vpack.c.bf16 %v423, %v423
    %v426 = vpack.c.bf16 %v424, %v424
    %v429 = vunpack.c.l.b16 %v425
    %v430 = vunpack.c.l.b16 %v426
    %v431 = vpack.c.b16 %v430, %v429
    %433 = vst [vmem:[#allocation2 + $0x38] sm:$0xff] %v431
    %v434 = vpack.c.bf16 %v316, %v316
    %v435 = vpack.c.bf16 %v317, %v317
    %v438 = vunpack.c.l.b16 %v434
    %v439 = vunpack.c.l.b16 %v435
    %v440 = vpack.c.b16 %v439, %v438
    %442 = vst [vmem:[#allocation2 + $0x48] sm:$0xff] %v440
    %443 = vrot.lane.b32.xlu0 %v316, 127
    %v444 = vpop.permute.xlu0 %443
    %445 = vrot.lane.b32.xlu0 %v317, 127
    %v446 = vpop.permute.xlu0 %445
    %v447 = vsel %vm195, %v444, %v446
    %v448 = vsel %vm195, %v446, %v444
    %v449 = vld [vmem:[%s198] ss:$8 sm:$0x3]
    %v451 = vlaneseq
    %v452 = vshrl.u32 %v451, 7
    %v453 = vsub.s32 0, %v452
    %v454 = vrot.slane %v449, %v453
    %v455 = vlaneseq
    %v456 = vshrl.u32 %v455, 7
    %v457 = vsub.s32 1, %v456
    %v458 = vrot.slane %v449, %v457
    %v461 = vmul.f32 %v447, %v454
    %v462 = vmul.f32 %v448, %v458
    %v463 = vpack.c.bf16 %v461, %v461
    %v464 = vpack.c.bf16 %v462, %v462
    %v467 = vunpack.c.l.b16 %v463
    %v468 = vunpack.c.l.b16 %v464
    %v469 = vpack.c.b16 %v468, %v467
    %471 = vst [vmem:[#allocation2 + $0x58] sm:$0xff] %v469
    %472 = vrot.lane.b32.xlu0 %v316, 113
    %v473 = vpop.permute.xlu0 %472
    %474 = vrot.lane.b32.xlu0 %v317, 113
    %v475 = vpop.permute.xlu0 %474
    %v476 = vsel %vm226, %v473, %v475
    %v477 = vsel %vm226, %v475, %v473
    %v478 = vld [vmem:[%s229] ss:$8 sm:$0x3]
    %v480 = vlaneseq
    %v481 = vshrl.u32 %v480, 7
    %v482 = vsub.s32 0, %v481
    %v483 = vrot.slane %v478, %v482
    %v484 = vlaneseq
    %v485 = vshrl.u32 %v484, 7
    %v486 = vsub.s32 1, %v485
    %v487 = vrot.slane %v478, %v486
    %v490 = vmul.f32 %v476, %v483
    %v491 = vmul.f32 %v477, %v487
    %v492 = vpack.c.bf16 %v490, %v490
    %v493 = vpack.c.bf16 %v491, %v491
    %v496 = vunpack.c.l.b16 %v492
    %v497 = vunpack.c.l.b16 %v493
    %v498 = vpack.c.b16 %v497, %v496
    %500 = vst [vmem:[#allocation2 + $0x68] sm:$0xff] %v498
    %501 = vrot.lane.b32.xlu0 %v316, 112
    %v502 = vpop.permute.xlu0 %501
    %503 = vrot.lane.b32.xlu0 %v317, 112
    %v504 = vpop.permute.xlu0 %503
    %v505 = vsel %vm257, %v502, %v504
    %v506 = vsel %vm257, %v504, %v502
    %v507 = vld [vmem:[%s260] ss:$8 sm:$0x3]
    %v509 = vlaneseq
    %v510 = vshrl.u32 %v509, 7
    %v511 = vsub.s32 0, %v510
    %v512 = vrot.slane %v507, %v511
    %v513 = vlaneseq
    %v514 = vshrl.u32 %v513, 7
    %v515 = vsub.s32 1, %v514
    %v516 = vrot.slane %v507, %v515
    %v519 = vmul.f32 %v505, %v512
    %v520 = vmul.f32 %v506, %v516
    %v521 = vpack.c.bf16 %v519, %v519
    %v522 = vpack.c.bf16 %v520, %v520
    %v525 = vunpack.c.l.b16 %v521
    %v526 = vunpack.c.l.b16 %v522
    %v527 = vpack.c.b16 %v526, %v525
    %529 = vst [vmem:[#allocation2 + $0x78] sm:$0xff] %v527
    %530 = vrot.lane.b32.xlu0 %v316, 111
    %v531 = vpop.permute.xlu0 %530
    %532 = vrot.lane.b32.xlu0 %v317, 111
    %v533 = vpop.permute.xlu0 %532
    %v534 = vsel %vm288, %v531, %v533
    %v535 = vsel %vm288, %v533, %v531
    %v536 = vld [vmem:[%s291] ss:$8 sm:$0x3]
    %v538 = vlaneseq
    %v539 = vshrl.u32 %v538, 7
    %v540 = vsub.s32 0, %v539
    %v541 = vrot.slane %v536, %v540
    %v542 = vlaneseq
    %v543 = vshrl.u32 %v542, 7
    %v544 = vsub.s32 1, %v543
    %v545 = vrot.slane %v536, %v544
    %v548 = vmul.f32 %v534, %v541
    %v549 = vmul.f32 %v535, %v545
    %v550 = vpack.c.bf16 %v548, %v548
    %v551 = vpack.c.bf16 %v549, %v549
    %v554 = vunpack.c.l.b16 %v550
    %v555 = vunpack.c.l.b16 %v551
    %v556 = vpack.c.b16 %v555, %v554
    %558 = vst [vmem:[#allocation2 + $0x88] sm:$0xff] %v556
    %v559 = vld [vmem:[#allocation8] sm:$0xf]
    %v560 = vld [vmem:[#allocation8 + $0x4] sm:$0xf]
    %v561 = vld [vmem:[#allocation8 + $0x8] sm:$0xf]
    %v562 = vld [vmem:[#allocation2] sm:$0xff]
    %v563 = vld [vmem:[#allocation2 + $0x8] sm:$0xff]
    %v564 = vld [vmem:[#allocation2 + $0x10] sm:$0xff]
    %v565 = vld [vmem:[#allocation2 + $0x18] sm:$0xff]
    %v566 = vld [vmem:[#allocation2 + $0x20] sm:$0xff]
    %v567 = vld [vmem:[#allocation2 + $0x28] sm:$0xff]
    %v568 = vld [vmem:[#allocation2 + $0x30] sm:$0xff]
    %v569 = vld [vmem:[#allocation2 + $0x38] sm:$0xff]
    %v570 = vld [vmem:[#allocation2 + $0x40] sm:$0xff]
    %v571 = vld [vmem:[#allocation2 + $0x48] sm:$0xff]
    %v572 = vld [vmem:[#allocation2 + $0x50] sm:$0xff]
    %v573 = vld [vmem:[#allocation2 + $0x58] sm:$0xff]
    %v574 = vld [vmem:[#allocation2 + $0x60] sm:$0xff]
    %v575 = vld [vmem:[#allocation2 + $0x68] sm:$0xff]
    %v576 = vld [vmem:[#allocation2 + $0x70] sm:$0xff]
    %v577 = vld [vmem:[#allocation2 + $0x78] sm:$0xff]
    %v578 = vld [vmem:[#allocation2 + $0x80] sm:$0xff]
    %v579 = vld [vmem:[#allocation2 + $0x88] sm:$0xff]
    %v583 = vunpack.c.l.b16 %v559
    %v584 = vunpack.c.l.b16 %v560
    %v585 = vunpack.c.l.b16 %v561
    %v586 = vpack.c.b16 %v584, %v583
    %v587 = vpack.c.b16 %v585, %v585
    %v606 = vunpack.c.l.b16 %v562
    %v607 = vunpack.c.h.b16 %v562
    %v608 = vunpack.c.l.b16 %v563
    %v609 = vunpack.c.h.b16 %v563
    %v610 = vunpack.c.l.b16 %v564
    %v611 = vunpack.c.h.b16 %v564
    %v612 = vunpack.c.l.b16 %v565
    %v613 = vunpack.c.h.b16 %v565
    %v614 = vunpack.c.l.b16 %v566
    %v615 = vunpack.c.h.b16 %v566
    %v616 = vunpack.c.l.b16 %v567
    %v617 = vunpack.c.h.b16 %v567
    %v618 = vunpack.c.l.b16 %v568
    %v619 = vunpack.c.h.b16 %v568
    %v620 = vunpack.c.l.b16 %v569
    %v621 = vunpack.c.h.b16 %v569
    %v622 = vunpack.c.l.b16 %v570
    %v623 = vunpack.c.h.b16 %v570
    %v624 = vunpack.c.l.b16 %v571
    %v625 = vunpack.c.h.b16 %v571
    %v626 = vunpack.c.l.b16 %v572
    %v627 = vunpack.c.h.b16 %v572
    %v628 = vunpack.c.l.b16 %v573
    %v629 = vunpack.c.h.b16 %v573
    %v630 = vunpack.c.l.b16 %v574
    %v631 = vunpack.c.h.b16 %v574
    %v632 = vunpack.c.l.b16 %v575
    %v633 = vunpack.c.h.b16 %v575
    %v634 = vunpack.c.l.b16 %v576
    %v635 = vunpack.c.h.b16 %v576
    %v636 = vunpack.c.l.b16 %v577
    %v637 = vunpack.c.h.b16 %v577
    %v638 = vunpack.c.l.b16 %v578
    %v639 = vunpack.c.h.b16 %v578
    %v640 = vunpack.c.l.b16 %v579
    %v641 = vunpack.c.h.b16 %v579
    %v642 = vpack.c.b16 %v610, %v606
    %v643 = vpack.c.b16 %v611, %v607
    %v644 = vpack.c.b16 %v612, %v608
    %v645 = vpack.c.b16 %v613, %v609
    %v646 = vpack.c.b16 %v618, %v614
    %v647 = vpack.c.b16 %v619, %v615
    %v648 = vpack.c.b16 %v620, %v616
    %v649 = vpack.c.b16 %v621, %v617
    %v650 = vpack.c.b16 %v626, %v622
    %v651 = vpack.c.b16 %v627, %v623
    %v652 = vpack.c.b16 %v628, %v624
    %v653 = vpack.c.b16 %v629, %v625
    %v654 = vpack.c.b16 %v634, %v630
    %v655 = vpack.c.b16 %v635, %v631
    %v656 = vpack.c.b16 %v636, %v632
    %v657 = vpack.c.b16 %v637, %v633
    %v658 = vpack.c.b16 %v638, %v638
    %v659 = vpack.c.b16 %v639, %v639
    %v660 = vpack.c.b16 %v640, %v640
    %v661 = vpack.c.b16 %v641, %v641
    %vm678 = vcmask 588800
    %v680 = vsel %vm678, %v586, 0
    %v683 = vsel %vm678, %v587, 0
    %vm685 = vcmask 1043456
    %v687 = vsel %vm685, %v658, 0
    %v690 = vsel %vm685, %v659, 0
    %v693 = vsel %vm685, %v660, 0
    %v696 = vsel %vm685, %v661, 0
    %698 = vmatprep.subr.bf16.mxu0 %v643
    %699 = vmatpush1.bf16.msra.mxu0 %v642
    %700 = vmatprep.subr.bf16.mxu0 %v647
    %701 = vmatpush1.bf16.msra.mxu0 %v646
    %702 = vmatprep.subr.bf16.mxu0 %v651
    %703 = vmatpush1.bf16.msra.mxu0 %v650
    %704 = vmatprep.subr.bf16.mxu0 %v655
    %705 = vmatpush1.bf16.msra.mxu0 %v654
    %706 = vmatprep.subr.bf16.mxu0 %v690
    %707 = vmatpush1.bf16.msra.mxu0 %v687
    %708 = vmatprep.subr.bf16.mxu0 0
    %709 = vmatpush1.bf16.msra.mxu0 0
    %710 = vmatprep.subr.bf16.mxu0 0
    %711 = vmatpush1.bf16.msra.mxu0 0
    %712 = vmatprep.subr.bf16.mxu0 0
    %713 = vmatpush1.bf16.msra.mxu0 0
    %714 = vmatprep.subr.bf16.mxu0 0
    %715 = vmatpush1.bf16.msra.mxu0 0
    %716 = vmatprep.subr.bf16.mxu0 0
    %717 = vmatpush1.bf16.msra.mxu0 0
    %718 = vmatprep.subr.bf16.mxu0 0
    %719 = vmatpush1.bf16.msra.mxu0 0
    %720 = vmatprep.subr.bf16.mxu0 0
    %721 = vmatpush1.bf16.msra.mxu0 0
    %722 = vmatprep.subr.bf16.mxu0 0
    %723 = vmatpush1.bf16.msra.mxu0 0
    %724 = vmatprep.subr.bf16.mxu0 0
    %725 = vmatpush1.bf16.msra.mxu0 0
    %726 = vmatprep.subr.bf16.mxu0 0
    %727 = vmatpush1.bf16.msra.mxu0 0
    %728 = vmatprep.subr.bf16.mxu0 0
    %729 = vmatpush1.bf16.msra.mxu0 0
    %730 = vmatprep.mubr.bf16.mxu0 0
    %731 = vmatmul.mubr.bf16.gmra.mrb[0].mxu0 %v680
    %v732 = vpop.f32.mrb[0].mxu0
    %v733 = vadd.f32 0.0, %v732
    %v734 = vpop.f32.mrb[0].mxu0
    %v735 = vadd.f32 0.0, %v734
    %v736 = vpop.f32.mrb[0].mxu0
    %v737 = vadd.f32 0.0, %v736
    %v738 = vpop.f32.mrb[0].mxu0
    %v739 = vadd.f32 0.0, %v738
    %740 = vmatprep.mubr.bf16.mxu0 0
    %741 = vmatmul.mubr.bf16.gmra.mrb[0].mxu0 %v683
    %v742 = vpop.f32.mrb[0].mxu0
    %v743 = vadd.f32 0.0, %v742
    %v744 = vpop.f32.mrb[0].mxu0
    %v745 = vadd.f32 0.0, %v744
    %v746 = vpop.f32.mrb[0].mxu0
    %v747 = vpop.f32.mrb[0].mxu0
    %748 = vdwg.mxu0
    %749 = vmatprep.subr.bf16.mxu0 %v645
    %750 = vmatpush1.bf16.msra.mxu0 %v644
    %751 = vmatprep.subr.bf16.mxu0 %v649
    %752 = vmatpush1.bf16.msra.mxu0 %v648
    %753 = vmatprep.subr.bf16.mxu0 %v653
    %754 = vmatpush1.bf16.msra.mxu0 %v652
    %755 = vmatprep.subr.bf16.mxu0 %v657
    %756 = vmatpush1.bf16.msra.mxu0 %v656
    %757 = vmatprep.subr.bf16.mxu0 %v696
    %758 = vmatpush1.bf16.msra.mxu0 %v693
    %759 = vmatprep.subr.bf16.mxu0 0
    %760 = vmatpush1.bf16.msra.mxu0 0
    %761 = vmatprep.subr.bf16.mxu0 0
    %762 = vmatpush1.bf16.msra.mxu0 0
    %763 = vmatprep.subr.bf16.mxu0 0
    %764 = vmatpush1.bf16.msra.mxu0 0
    %765 = vmatprep.subr.bf16.mxu0 0
    %766 = vmatpush1.bf16.msra.mxu0 0
    %767 = vmatprep.subr.bf16.mxu0 0
    %768 = vmatpush1.bf16.msra.mxu0 0
    %769 = vmatprep.subr.bf16.mxu0 0
    %770 = vmatpush1.bf16.msra.mxu0 0
    %771 = vmatprep.subr.bf16.mxu0 0
    %772 = vmatpush1.bf16.msra.mxu0 0
    %773 = vmatprep.subr.bf16.mxu0 0
    %774 = vmatpush1.bf16.msra.mxu0 0
    %775 = vmatprep.subr.bf16.mxu0 0
    %776 = vmatpush1.bf16.msra.mxu0 0
    %777 = vmatprep.subr.bf16.mxu0 0
    %778 = vmatpush1.bf16.msra.mxu0 0
    %779 = vmatprep.subr.bf16.mxu0 0
    %780 = vmatpush1.bf16.msra.mxu0 0
    %781 = vmatprep.mubr.bf16.mxu0 0
    %782 = vmatmul.mubr.bf16.gmra.mrb[0].mxu0 %v680
    %v783 = vpop.f32.mrb[0].mxu0
    %v784 = vadd.f32 0.0, %v783
    %v785 = vpop.f32.mrb[0].mxu0
    %v786 = vadd.f32 0.0, %v785
    %v787 = vpop.f32.mrb[0].mxu0
    %v788 = vadd.f32 0.0, %v787
    %v789 = vpop.f32.mrb[0].mxu0
    %v790 = vadd.f32 0.0, %v789
    %791 = vmatprep.mubr.bf16.mxu0 0
    %792 = vmatmul.mubr.bf16.gmra.mrb[0].mxu0 %v683
    %v793 = vpop.f32.mrb[0].mxu0
    %v794 = vadd.f32 0.0, %v793
    %v795 = vpop.f32.mrb[0].mxu0
    %v796 = vadd.f32 0.0, %v795
    %v797 = vpop.f32.mrb[0].mxu0
    %v798 = vpop.f32.mrb[0].mxu0
    %799 = vdwg.mxu0
    %v800 = vadd.f32 %v733, %v735
    %801 = vadd.xlane.f32.xlu0 %v800
    %v802 = vpop.xlane.xlu0 %801
    %v803 = vadd.f32 %v737, %v739
    %804 = vadd.xlane.f32.xlu0 %v803
    %v805 = vpop.xlane.xlu0 %804
    %v806 = vadd.f32 %v743, %v745
    %807 = vadd.xlane.f32.xlu0 %v806
    %v808 = vpop.xlane.xlu0 %807
    %v809 = vmul.f32 %v802, 0.00390625
    %v810 = vmul.f32 %v805, 0.00390625
    %v811 = vmul.f32 %v808, 0.00390625
    %v812 = vmul.f32 %v733, %v733
    %v813 = vmul.f32 %v735, %v735
    %v814 = vmul.f32 %v737, %v737
    %v815 = vmul.f32 %v739, %v739
    %v816 = vmul.f32 %v743, %v743
    %v817 = vmul.f32 %v745, %v745
    %v818 = vadd.f32 %v812, %v813
    %819 = vadd.xlane.f32.xlu0 %v818
    %v820 = vpop.xlane.xlu0 %819
    %v821 = vadd.f32 %v814, %v815
    %822 = vadd.xlane.f32.xlu0 %v821
    %v823 = vpop.xlane.xlu0 %822
    %v824 = vadd.f32 %v816, %v817
    %825 = vadd.xlane.f32.xlu0 %v824
    %v826 = vpop.xlane.xlu0 %825
    %v827 = vmul.f32 %v820, 0.00390625
    %v828 = vmul.f32 %v823, 0.00390625
    %v829 = vmul.f32 %v826, 0.00390625
    %v830 = vmul.f32 %v809, %v809
    %v831 = vmul.f32 %v810, %v810
    %v832 = vmul.f32 %v811, %v811
    %v833 = vsub.f32 %v827, %v830
    %v834 = vsub.f32 %v828, %v831
    %v835 = vsub.f32 %v829, %v832
    %v836 = vmax.f32 %v833, 0.0
    %v837 = vmax.f32 %v834, 0.0
    %v838 = vmax.f32 %v835, 0.0
    %v839 = vadd.f32 %v836, 1e-05
    %v840 = vadd.f32 %v837, 1e-05
    %v841 = vadd.f32 %v838, 1e-05
    %v842 = vrsqrt.pop %v839
    %v843 = vrsqrt.pop %v840
    %v844 = vrsqrt.pop %v841
    %v845 = vmul.f32 %v842, 0.33333334
    %v846 = vmul.f32 %v843, 0.33333334
    %v847 = vmul.f32 %v844, 0.33333334
    %v848 = vsub.f32 %v733, %v809
    %v849 = vsub.f32 %v735, %v809
    %v850 = vsub.f32 %v737, %v810
    %v851 = vsub.f32 %v739, %v810
    %v852 = vsub.f32 %v743, %v811
    %v853 = vsub.f32 %v745, %v811
    %v854 = vmul.f32 %v848, %v845
    %v855 = vmul.f32 %v849, %v845
    %v856 = vmul.f32 %v850, %v846
    %v857 = vmul.f32 %v851, %v846
    %v858 = vmul.f32 %v852, %v847
    %v859 = vmul.f32 %v853, %v847
    %v860 = vmul.f32 %v854, 0.2
    %v861 = vmul.f32 %v855, 0.2
    %v862 = vmul.f32 %v856, 0.2
    %v863 = vmul.f32 %v857, 0.2
    %v864 = vmul.f32 %v858, 0.2
    %v865 = vmul.f32 %v859, 0.2
    %v866 = vmax.f32 %v854, %v860
    %v867 = vmax.f32 %v855, %v861
    %v868 = vmax.f32 %v856, %v862
    %v869 = vmax.f32 %v857, %v863
    %v870 = vmax.f32 %v858, %v864
    %v871 = vmax.f32 %v859, %v865
    %v872 = vadd.f32 %v866, %v868
    %v873 = vadd.f32 %v867, %v869
    %v874 = vadd.f32 %v872, %v870
    %v875 = vadd.f32 %v873, %v871
    %876 = vst [vmem:[#allocation9] sm:$0xff] %v874
    %877 = vst [vmem:[#allocation9 + $0x8] sm:$0xff] %v875
    %v878 = vadd.f32 %v784, %v786
    %879 = vadd.xlane.f32.xlu0 %v878
    %v880 = vpop.xlane.xlu0 %879
    %v881 = vadd.f32 %v788, %v790
    %882 = vadd.xlane.f32.xlu0 %v881
    %v883 = vpop.xlane.xlu0 %882
    %v884 = vadd.f32 %v794, %v796
    %885 = vadd.xlane.f32.xlu0 %v884
    %v886 = vpop.xlane.xlu0 %885
    %v887 = vmul.f32 %v880, 0.00390625
    %v888 = vmul.f32 %v883, 0.00390625
    %v889 = vmul.f32 %v886, 0.00390625
    %v890 = vmul.f32 %v784, %v784
    %v891 = vmul.f32 %v786, %v786
    %v892 = vmul.f32 %v788, %v788
    %v893 = vmul.f32 %v790, %v790
    %v894 = vmul.f32 %v794, %v794
    %v895 = vmul.f32 %v796, %v796
    %v896 = vadd.f32 %v890, %v891
    %897 = vadd.xlane.f32.xlu0 %v896
    %v898 = vpop.xlane.xlu0 %897
    %v899 = vadd.f32 %v892, %v893
    %900 = vadd.xlane.f32.xlu0 %v899
    %v901 = vpop.xlane.xlu0 %900
    %v902 = vadd.f32 %v894, %v895
    %903 = vadd.xlane.f32.xlu0 %v902
    %v904 = vpop.xlane.xlu0 %903
    %v905 = vmul.f32 %v898, 0.00390625
    %v906 = vmul.f32 %v901, 0.00390625
    %v907 = vmul.f32 %v904, 0.00390625
    %v908 = vmul.f32 %v887, %v887
    %v909 = vmul.f32 %v888, %v888
    %v910 = vmul.f32 %v889, %v889
    %v911 = vsub.f32 %v905, %v908
    %v912 = vsub.f32 %v906, %v909
    %v913 = vsub.f32 %v907, %v910
    %v914 = vmax.f32 %v911, 0.0
    %v915 = vmax.f32 %v912, 0.0
    %v916 = vmax.f32 %v913, 0.0
    %v917 = vadd.f32 %v914, 1e-05
    %v918 = vadd.f32 %v915, 1e-05
    %v919 = vadd.f32 %v916, 1e-05
    %v920 = vrsqrt.pop %v917
    %v921 = vrsqrt.pop %v918
    %v922 = vrsqrt.pop %v919
    %v923 = vmul.f32 %v920, 0.33333334
    %v924 = vmul.f32 %v921, 0.33333334
    %v925 = vmul.f32 %v922, 0.33333334
    %v926 = vsub.f32 %v784, %v887
    %v927 = vsub.f32 %v786, %v887
    %v928 = vsub.f32 %v788, %v888
    %v929 = vsub.f32 %v790, %v888
    %v930 = vsub.f32 %v794, %v889
    %v931 = vsub.f32 %v796, %v889
    %v932 = vmul.f32 %v926, %v923
    %v933 = vmul.f32 %v927, %v923
    %v934 = vmul.f32 %v928, %v924
    %v935 = vmul.f32 %v929, %v924
    %v936 = vmul.f32 %v930, %v925
    %v937 = vmul.f32 %v931, %v925
    %v938 = vmul.f32 %v932, 0.2
    %v939 = vmul.f32 %v933, 0.2
    %v940 = vmul.f32 %v934, 0.2
    %v941 = vmul.f32 %v935, 0.2
    %v942 = vmul.f32 %v936, 0.2
    %v943 = vmul.f32 %v937, 0.2
    %v944 = vmax.f32 %v932, %v938
    %v945 = vmax.f32 %v933, %v939
    %v946 = vmax.f32 %v934, %v940
    %v947 = vmax.f32 %v935, %v941
    %v948 = vmax.f32 %v936, %v942
    %v949 = vmax.f32 %v937, %v943
    %v950 = vadd.f32 %v944, %v946
    %v951 = vadd.f32 %v945, %v947
    %v952 = vadd.f32 %v950, %v948
    %v953 = vadd.f32 %v951, %v949
    %s954 = scalar_lea.vmem [#allocation9], 16
    %955 = vst [vmem:[%s954] sm:$0xff] %v952
    %956 = vst [vmem:[%s954 + $0x8] sm:$0xff] %v953
    // Predicated region
    $region26: #{tpu_custom_call.1} parent=1 // pred_check
      _
    $region27: #{tpu_custom_call.1} parent=1 // pred_check_branch
      %958 = sbr.rel (0) target = $region29
    $region28: #{tpu_custom_call.1} parent=1 // pred_region
      %s960 = ssub.s32 512, 512
      %961 = vsyncadd [#allocation5], %s960
      %s962 = sshll.u32 [#allocation9], 4
      %s963 = int_to_ptr.vmem [resolvable:$true] %s962
      %968 = dma.vmem_to_hbm [thread:$0]  %s963, 512, %s3, [#allocation5], 256, 256, 16
    $region29: #{tpu_custom_call.1} parent=1 // pred_fallthru
      _
    // Predicated region
    $region30: #{tpu_custom_call.1} parent=1 // pred_check
      _
    $region31: #{tpu_custom_call.1} parent=1 // pred_check_branch
      %970 = sbr.rel (0) target = $region33
    $region32: #{tpu_custom_call.1} parent=1 // pred_region
      %971 = dma.done [#allocation5], 512
    $region33: #{tpu_custom_call.1} parent=1 // pred_fallthru
      _
    %972 = vsyncpa [#allocation4], 1
    %973 = vsyncpa [#allocation7], 1
    %974 = vsyncpa [#allocation5], 1

</llo_original>
